<compile_context>
chip_gen: v6e
topology: v6e:2x2x1
jax: 0.10.0
libtpu: 0.0.40
codegen_flags: <defaults>
</compile_context>

<pallas_src>
import functools

import jax
import jax.numpy as jnp
from jax.experimental import pallas as pl
from jax.experimental.pallas import tpu as pltpu

_EPS = 1e-5                              # nn.BatchNorm2d default eps
_VMEM_LIMIT = 48 * 1024 * 1024           # scoped VMEM cap; safe on v5e/v6e/v7x
_FUSED_VMEM_BUDGET = 24 * 1024 * 1024    # est. usage allowed for the fused path
_TILED_BLOCK_CAP = 4 * 1024 * 1024       # f32 bytes per x block (tiled path)
_TILED_BLOCK_TARGET = 1 * 1024 * 1024    # aim for at least this per x block


# ---------------------------------------------------------------------------
# Block-size selection helpers
# ---------------------------------------------------------------------------
def _mult8_divisors_desc(c):
    """Divisors of C that are multiples of 8 (descending); [C] if C % 8 != 0."""
    if c % 8 != 0:
        return [c]
    return [d for d in range(c, 0, -8) if c % d == 0]


def _hw_tile_options(hw, cap=16384):
    """Multiples of 128 dividing H*W (descending, capped); [hw] if ragged."""
    if hw % 128 != 0:
        return [hw]
    opts = [m for m in range(128, min(hw, cap) + 1, 128) if hw % m == 0]
    return sorted(opts, reverse=True)


def _divisors_desc(n):
    return [d for d in range(n, 0, -1) if n % d == 0]


def _choose_fused_cblk(n, c, hw, in_bytes, out_bytes, budget):
    """Largest channel block whose whole (N, c_blk, H*W) slab fits the budget."""
    # 2x double-buffered input + 2x double-buffered output + ~2 f32 temporaries.
    per_elem = 2 * in_bytes + 2 * out_bytes + 2 * 4
    fitting = [cb for cb in _mult8_divisors_desc(c)
               if n * cb * hw * per_elem <= budget]
    if not fitting:
        return None
    c_blk = fitting[0]
    # Prefer >=2 channel blocks (v7x megacore) when slabs stay >= 1 MiB.
    multi = [cb for cb in fitting if c // cb >= 2]
    if c // c_blk == 1 and multi and n * multi[0] * hw * in_bytes >= (1 << 20):
        c_blk = multi[0]
    return c_blk


def _choose_tiled_blocks(n, c, hw, block_cap):
    """(n_blk, c_blk, hw_tile) for the two-sweep path, targeting 1-4 MiB blocks."""
    cb_opts = _mult8_divisors_desc(c)
    hw_opts = _hw_tile_options(hw)
    c_blk, hw_tile = cb_opts[0], hw_opts[0]

    # Shrink the spatial tile first, then the channel block, to respect the cap.
    ci = hi = 0
    while c_blk * hw_tile * 4 > block_cap:
        if hi + 1 < len(hw_opts):
            hi += 1
            hw_tile = hw_opts[hi]
        elif ci + 1 < len(cb_opts):
            ci += 1
            c_blk = cb_opts[ci]
        else:
            break

    # When the spatial tile is the full (possibly ragged) map, fatten the block
    # with several images per grid step instead of tiny per-image blocks.
    n_blk = 1
    if hw_tile == hw:
        for nb in _divisors_desc(n):
            if nb * c_blk * hw_tile * 4 <= block_cap:
                n_blk = nb
                break

    # Prefer >=2 channel blocks (v7x megacore) when blocks stay fat enough.
    if c // c_blk == 1 and len(cb_opts) > 1:
        if n_blk * cb_opts[1] * hw_tile * 4 >= _TILED_BLOCK_TARGET:
            c_blk = cb_opts[1]

    return n_blk, c_blk, hw_tile


# ---------------------------------------------------------------------------
# Kernels
# ---------------------------------------------------------------------------
def _bn_relu_fused_kernel(x_ref, gamma_ref, beta_ref, o_ref, *, inv_count, eps):
    """Single-pass: whole (N, c_blk, H*W) channel-block slab resident in VMEM."""
    x = x_ref[...].astype(jnp.float32)                          # (N, c_blk, HW)
    mean = jnp.sum(jnp.sum(x, axis=2, keepdims=True), axis=0, keepdims=True)
    mean = mean * inv_count                                     # (1, c_blk, 1)
    centered = x - mean
    var = jnp.sum(jnp.sum(centered * centered, axis=2, keepdims=True),
                  axis=0, keepdims=True) * inv_count            # (1, c_blk, 1)
    inv_std = jax.lax.rsqrt(var + eps)
    scale = gamma_ref[...][None, :, :] * inv_std                # (1, c_blk, 1)
    shift = beta_ref[...][None, :, :] - mean * scale
    o_ref[...] = jnp.maximum(x * scale + shift, 0.0).astype(o_ref.dtype)


def _bn_relu_two_sweep_kernel(x_ref, gamma_ref, beta_ref, o_ref,
                              sum_acc, sq_acc, scale_ref, shift_ref,
                              *, inv_count, eps):
    # grid axes: 0 = channel block (parallel), 1 = sweep, 2 = N block, 3 = hw tile
    s = pl.program_id(1)
    ni = pl.program_id(2)
    ti = pl.program_id(3)
    last_n = pl.num_programs(2) - 1
    last_t = pl.num_programs(3) - 1

    @pl.when(s == 0)
    def _stats_sweep():
        @pl.when((ni == 0) & (ti == 0))
        def _init():
            sum_acc[...] = jnp.zeros_like(sum_acc)
            sq_acc[...] = jnp.zeros_like(sq_acc)

        x = x_ref[...].astype(jnp.float32)                      # (n_blk, c_blk, T)
        # Per-tile partial reduction -> (c_blk, 1).  Keeps the accumulators
        # tiny and off the vector-store slot (vs full-width scratch); the lane
        # reduce hides under the HBM DMA.
        sum_acc[...] += jnp.sum(jnp.sum(x, axis=2, keepdims=True), axis=0)
        sq_acc[...] += jnp.sum(jnp.sum(x * x, axis=2, keepdims=True), axis=0)

        @pl.when((ni == last_n) & (ti == last_t))
        def _finalize():
            mean = sum_acc[...] * inv_count                     # (c_blk, 1)
            # E[x^2] - mean^2 in f32; clamp against cancellation.
            var = jnp.maximum(sq_acc[...] * inv_count - mean * mean, 0.0)
            inv_std = jax.lax.rsqrt(var + eps)
            scale = gamma_ref[...] * inv_std
            scale_ref[...] = scale
            shift_ref[...] = beta_ref[...] - mean * scale

    @pl.when(s == 1)
    def _normalize_sweep():
        x = x_ref[...].astype(jnp.float32)
        scale = scale_ref[...][None, :, :]                      # (1, c_blk, 1)
        shift = shift_ref[...][None, :, :]
        o_ref[...] = jnp.maximum(x * scale + shift, 0.0).astype(o_ref.dtype)


# ---------------------------------------------------------------------------
# Wrapper
# ---------------------------------------------------------------------------
def bn_relu(x_nchw, gamma, beta, *, eps=_EPS,
            fused_vmem_budget=_FUSED_VMEM_BUDGET,
            tiled_block_cap=_TILED_BLOCK_CAP):
    """BatchNorm2d (batch stats, biased variance) + ReLU on an NCHW input."""
    n, c, h, w = x_nchw.shape
    hw = h * w
    x_v = x_nchw.reshape(n, c, hw)          # free view: C -> sublanes, HW -> lanes
    g = gamma.reshape(c, 1).astype(jnp.float32)
    b = beta.reshape(c, 1).astype(jnp.float32)
    inv_count = 1.0 / float(n * hw)
    in_bytes = x_nchw.dtype.itemsize
    out_bytes = in_bytes

    c_blk = _choose_fused_cblk(n, c, hw, in_bytes, out_bytes, fused_vmem_budget)

    if c_blk is not None:
        # ---- Path 1: single-pass, whole channel-block slab in VMEM ----------
        kernel = functools.partial(_bn_relu_fused_kernel,
                                   inv_count=inv_count, eps=float(eps))
        out_v = pl.pallas_call(
            kernel,
            out_shape=jax.ShapeDtypeStruct((n, c, hw), x_nchw.dtype),
            grid_spec=pltpu.PrefetchScalarGridSpec(
                num_scalar_prefetch=0,
                grid=(c // c_blk,),
                in_specs=[
                    pl.BlockSpec((n, c_blk, hw), lambda cb: (0, cb, 0)),
                    pl.BlockSpec((c_blk, 1), lambda cb: (cb, 0)),
                    pl.BlockSpec((c_blk, 1), lambda cb: (cb, 0)),
                ],
                out_specs=pl.BlockSpec((n, c_blk, hw), lambda cb: (0, cb, 0)),
            ),
            compiler_params=pltpu.CompilerParams(
                dimension_semantics=("parallel",),
                vmem_limit_bytes=_VMEM_LIMIT,
            ),
        )(x_v, g, b)
        return out_v.reshape(n, c, h, w)

    # ---- Path 2: two-sweep tiled fallback (stats sweep + normalize sweep) ---
    n_blk, c_blk, hw_tile = _choose_tiled_blocks(n, c, hw, tiled_block_cap)
    kernel = functools.partial(_bn_relu_two_sweep_kernel,
                               inv_count=inv_count, eps=float(eps))
    out_v = pl.pallas_call(
        kernel,
        out_shape=jax.ShapeDtypeStruct((n, c, hw), x_nchw.dtype),
        grid_spec=pltpu.PrefetchScalarGridSpec(
            num_scalar_prefetch=0,
            grid=(c // c_blk, 2, n // n_blk, hw // hw_tile),
            in_specs=[
                pl.BlockSpec((n_blk, c_blk, hw_tile),
                             lambda cb, s, ni, ti: (ni, cb, ti)),
                pl.BlockSpec((c_blk, 1), lambda cb, s, ni, ti: (cb, 0)),
                pl.BlockSpec((c_blk, 1), lambda cb, s, ni, ti: (cb, 0)),
            ],
            # During the stats sweep (s == 0) the output block is parked at
            # (0, cb, 0); it is only flushed to HBM after sweep 1 has fully
            # written it (the block index does not change before then).
            out_specs=pl.BlockSpec(
                (n_blk, c_blk, hw_tile),
                lambda cb, s, ni, ti: (s * ni, cb, s * ti)),
            scratch_shapes=[
                pltpu.VMEM((c_blk, 1), jnp.float32),   # per-channel sum
                pltpu.VMEM((c_blk, 1), jnp.float32),   # per-channel sum of squares
                pltpu.VMEM((c_blk, 1), jnp.float32),   # per-channel scale
                pltpu.VMEM((c_blk, 1), jnp.float32),   # per-channel shift
            ],
        ),
        compiler_params=pltpu.CompilerParams(
            dimension_semantics=("parallel", "arbitrary", "arbitrary", "arbitrary"),
            vmem_limit_bytes=_VMEM_LIMIT,
        ),
    )(x_v, g, b)
    return out_v.reshape(n, c, h, w)


# ---------------------------------------------------------------------------
# Reference + self-test
# ---------------------------------------------------------------------------
def _reference(x_nchw, gamma, beta, eps=_EPS):
    x = x_nchw.astype(jnp.float32)
    mean = jnp.mean(x, axis=(0, 2, 3), keepdims=True)
    var = jnp.mean((x - mean) ** 2, axis=(0, 2, 3), keepdims=True)
    y = (x - mean) * jax.lax.rsqrt(var + eps)
    y = y * gamma.reshape(1, -1, 1, 1) + beta.reshape(1, -1, 1, 1)
    return jnp.maximum(y, 0.0).astype(x_nchw.dtype)


if __name__ == "__main__":
    key = jax.random.PRNGKey(0)

    # 1) Module-sized input -> fused single-pass path.
    N, C, H, W = 2, 4, 16, 16
    x = jax.random.normal(key, (N, C, H, W), dtype=jnp.float32)
    gamma = jnp.ones((C,), dtype=jnp.float32)     # nn.BatchNorm2d default init
    beta = jnp.zeros((C,), dtype=jnp.float32)

    out = jax.block_until_ready(bn_relu(x, gamma, beta))
    ref = _reference(x, gamma, beta)
    assert out.shape == (N, C, H, W) and out.dtype == x.dtype
    assert jnp.allclose(out, ref, atol=1e-4, rtol=1e-4), \
        float(jnp.max(jnp.abs(out - ref)))

    # 2) Exercise the two-sweep tiled fallback (forced via zero fused budget and
    #    a small block cap so several N / hw tiles are accumulated).
    N2, C2, H2, W2 = 2, 16, 32, 32
    x2 = jax.random.normal(jax.random.PRNGKey(1), (N2, C2, H2, W2), jnp.float32)
    g2 = jax.random.normal(jax.random.PRNGKey(2), (C2,), jnp.float32)
    b2 = jax.random.normal(jax.random.PRNGKey(3), (C2,), jnp.float32)
    out2 = jax.block_until_ready(
        bn_relu(x2, g2, b2, fused_vmem_budget=0, tiled_block_cap=32 * 1024))
    ref2 = _reference(x2, g2, b2)
    assert jnp.allclose(out2, ref2, atol=1e-4, rtol=1e-4), \
        float(jnp.max(jnp.abs(out2 - ref2)))

    print("KERNEL_OK")
</pallas_src>

<mosaic_0001>
module attributes {stable_mosaic.version = 11 : i64} {
  func.func @_bn_relu_fused_kernel(%arg0: i32, %arg1: memref<2x4x256xf32, #tpu.memory_space<vmem>>, %arg2: memref<4x1xf32, #tpu.memory_space<vmem>>, %arg3: memref<4x1xf32, #tpu.memory_space<vmem>>, %arg4: memref<2x4x256xf32, #tpu.memory_space<vmem>>) attributes {dimension_semantics = [#tpu.dimension_semantics<parallel>], iteration_bounds = array<i64: 1>, scalar_prefetch = 0 : i64, scratch_operands = 0 : i64, tpu.core_type = #tpu.core_type<tc>, window_params = [{transform_indices = @transform_0, window_bounds = array<i64: 2, 4, 256>}, {transform_indices = @transform_1, window_bounds = array<i64: 4, 1>}, {transform_indices = @transform_2, window_bounds = array<i64: 4, 1>}, {transform_indices = @transform_3, window_bounds = array<i64: 2, 4, 256>}]} {
    %c0 = arith.constant 0 : index
    %c0_0 = arith.constant 0 : index
    %c0_1 = arith.constant 0 : index
    %0 = vector.load %arg1[%c0, %c0_0, %c0_1] : memref<2x4x256xf32, #tpu.memory_space<vmem>>, vector<2x4x256xf32>
    %cst = arith.constant dense<0.000000e+00> : vector<2x4xf32>
    %1 = vector.multi_reduction <add>, %0, %cst [2] : vector<2x4x256xf32> to vector<2x4xf32>
    %2 = vector.shape_cast %1 : vector<2x4xf32> to vector<2x4x1xf32>
    %cst_2 = arith.constant dense<0.000000e+00> : vector<4x1xf32>
    %3 = vector.multi_reduction <add>, %2, %cst_2 [0] : vector<2x4x1xf32> to vector<4x1xf32>
    %4 = vector.shape_cast %3 : vector<4x1xf32> to vector<1x4x1xf32>
    %cst_3 = arith.constant 0.001953125 : f32
    %5 = vector.broadcast %cst_3 : f32 to vector<1x4x1xf32>
    %6 = arith.mulf %4, %5 : vector<1x4x1xf32>
    %7 = vector.broadcast %6 : vector<1x4x1xf32> to vector<2x4x256xf32>
    %8 = arith.subf %0, %7 : vector<2x4x256xf32>
    %9 = arith.mulf %8, %8 : vector<2x4x256xf32>
    %cst_4 = arith.constant dense<0.000000e+00> : vector<2x4xf32>
    %10 = vector.multi_reduction <add>, %9, %cst_4 [2] : vector<2x4x256xf32> to vector<2x4xf32>
    %11 = vector.shape_cast %10 : vector<2x4xf32> to vector<2x4x1xf32>
    %cst_5 = arith.constant dense<0.000000e+00> : vector<4x1xf32>
    %12 = vector.multi_reduction <add>, %11, %cst_5 [0] : vector<2x4x1xf32> to vector<4x1xf32>
    %13 = vector.shape_cast %12 : vector<4x1xf32> to vector<1x4x1xf32>
    %cst_6 = arith.constant 0.001953125 : f32
    %14 = vector.broadcast %cst_6 : f32 to vector<1x4x1xf32>
    %15 = arith.mulf %13, %14 : vector<1x4x1xf32>
    %cst_7 = arith.constant 9.99999974E-6 : f32
    %16 = vector.broadcast %cst_7 : f32 to vector<1x4x1xf32>
    %17 = arith.addf %15, %16 : vector<1x4x1xf32>
    %18 = math.rsqrt %17 : vector<1x4x1xf32>
    %c0_8 = arith.constant 0 : index
    %c0_9 = arith.constant 0 : index
    %19 = vector.load %arg2[%c0_8, %c0_9] : memref<4x1xf32, #tpu.memory_space<vmem>>, vector<4x1xf32>
    %20 = vector.shape_cast %19 : vector<4x1xf32> to vector<1x4x1xf32>
    %21 = arith.mulf %20, %18 : vector<1x4x1xf32>
    %c0_10 = arith.constant 0 : index
    %c0_11 = arith.constant 0 : index
    %22 = vector.load %arg3[%c0_10, %c0_11] : memref<4x1xf32, #tpu.memory_space<vmem>>, vector<4x1xf32>
    %23 = vector.shape_cast %22 : vector<4x1xf32> to vector<1x4x1xf32>
    %24 = arith.mulf %6, %21 : vector<1x4x1xf32>
    %25 = arith.subf %23, %24 : vector<1x4x1xf32>
    %26 = vector.broadcast %21 : vector<1x4x1xf32> to vector<2x4x256xf32>
    %27 = arith.mulf %0, %26 : vector<2x4x256xf32>
    %28 = vector.broadcast %25 : vector<1x4x1xf32> to vector<2x4x256xf32>
    %29 = arith.addf %27, %28 : vector<2x4x256xf32>
    %cst_12 = arith.constant 0.000000e+00 : f32
    %30 = vector.broadcast %cst_12 : f32 to vector<2x4x256xf32>
    %31 = arith.maximumf %29, %30 : vector<2x4x256xf32>
    %c0_13 = arith.constant 0 : index
    %c0_14 = arith.constant 0 : index
    %c0_15 = arith.constant 0 : index
    %32 = vector.load %arg4[%c0_13, %c0_14, %c0_15] : memref<2x4x256xf32, #tpu.memory_space<vmem>>, vector<2x4x256xf32>
    tpu.vector_store %arg4[%c0_13, %c0_14, %c0_15], %31 {strides = array<i32>} : memref<2x4x256xf32, #tpu.memory_space<vmem>>, vector<2x4x256xf32>,
    return
  }
  func.func @transform_0(%arg0: i32) -> (i32, i32, i32) {
    %c0_i32 = arith.constant 0 : i32
    %c0_i32_0 = arith.constant 0 : i32
    %c0_i32_1 = arith.constant 0 : i32
    return %c0_i32, %arg0, %c0_i32_0 : i32, i32, i32
  }
  func.func @transform_1(%arg0: i32) -> (i32, i32) {
    %c0_i32 = arith.constant 0 : i32
    %c0_i32_0 = arith.constant 0 : i32
    return %arg0, %c0_i32 : i32, i32
  }
  func.func @transform_2(%arg0: i32) -> (i32, i32) {
    %c0_i32 = arith.constant 0 : i32
    %c0_i32_0 = arith.constant 0 : i32
    return %arg0, %c0_i32 : i32, i32
  }
  func.func @transform_3(%arg0: i32) -> (i32, i32, i32) {
    %c0_i32 = arith.constant 0 : i32
    %c0_i32_0 = arith.constant 0 : i32
    %c0_i32_1 = arith.constant 0 : i32
    return %c0_i32, %arg0, %c0_i32_0 : i32, i32, i32
  }
}

</mosaic_0001>

<llo_original>
// kernel: tpu_custom_call.1
$region0: #{tpu_custom_call.1}
  #allocation0 [shape = 'u32[]', space=smem, size = 0x4, offset = 0x4, fixed_abs, tag = 'smem constant byte address 0x4 - core index']
  #allocation1 [shape = 'u32[144,128]{1,0:T(1,128)}', space=vmem, size = 0x12000, scoped, tag = 'internal scratch']
  %s0 = inlined_call_operand.hbm [shape: f32[2,4,256], index: 0, kind: input, shape index: {}]
  %s1 = inlined_call_operand.vmem [shape: f32[4,1], index: 1, kind: input, shape index: {}]
  %s2 = inlined_call_operand.vmem [shape: f32[4,1], index: 2, kind: input, shape index: {}]
  %s3 = inlined_call_operand.hbm [shape: f32[2,4,256], index: 3, kind: output, shape index: {}]
  %s4 = sld [smem:[#allocation0]]
  $region26: #{tpu_custom_call.1} parent=0
    _
  %s6 = ssub.s32 1, %s4
  %s7 = scalar_select 0, %s6, %s4
  $region1: #{tpu_custom_call.1} parent=0
    #allocation2 [shape = 'u8[8192]{0}', space=vmem, size = 0x2000, scoped, tag = 'input window, operand 0, single buffered']
    #allocation3 [shape = 's32[1]{0}', space=sflag, size = 0x4, scoped, tag = 'scoped memory for tpu_custom_call.1']
    #allocation4 [shape = 's32[1]{0}', space=sflag, size = 0x4, scoped, tag = 'scoped memory for tpu_custom_call.1']
    #allocation5 [shape = 'u8[8192]{0}', space=vmem, size = 0x2000, scoped, tag = 'output window, operand 0, single buffered']
    %8 = vsyncpa [#allocation3], 0
    %9 = vsyncpa [#allocation4], 0
    // Predicated region
    $region2: #{tpu_custom_call.1} parent=1 // pred_check
      _
    $region3: #{tpu_custom_call.1} parent=1 // pred_check_branch
      %11 = sbr.rel (0) target = $region5
    $region4: #{tpu_custom_call.1} parent=1 // pred_region
      %s13 = ssub.s32 256, 256
      %14 = vsyncadd [#allocation3], %s13
      %s15 = sshll.u32 [#allocation2], 4
      %s16 = int_to_ptr.vmem [resolvable:$true] %s15
      %21 = dma.hbm_to_vmem [thread:$0]  %s0, 256, %s16, [#allocation3], 128, 128, 8
    $region5: #{tpu_custom_call.1} parent=1 // pred_fallthru
      _
    // Predicated region
    $region6: #{tpu_custom_call.1} parent=1 // pred_check
      _
    $region7: #{tpu_custom_call.1} parent=1 // pred_check_branch
      %23 = sbr.rel (0) target = $region9
    $region8: #{tpu_custom_call.1} parent=1 // pred_region
      _
    $region9: #{tpu_custom_call.1} parent=1 // pred_fallthru
      _
    // Predicated region
    $region10: #{tpu_custom_call.1} parent=1 // pred_check
      _
    $region11: #{tpu_custom_call.1} parent=1 // pred_check_branch
      %25 = sbr.rel (0) target = $region13
    $region12: #{tpu_custom_call.1} parent=1 // pred_region
      _
    $region13: #{tpu_custom_call.1} parent=1 // pred_fallthru
      _
    // Predicated region
    $region14: #{tpu_custom_call.1} parent=1 // pred_check
      _
    $region15: #{tpu_custom_call.1} parent=1 // pred_check_branch
      %27 = sbr.rel (0) target = $region17
    $region16: #{tpu_custom_call.1} parent=1 // pred_region
      %28 = dma.done [#allocation3], 256
    $region17: #{tpu_custom_call.1} parent=1 // pred_fallthru
      _
    %v29 = vld [vmem:[#allocation2] sm:$0xff]
    %v30 = vld [vmem:[#allocation2 + $0x8] sm:$0xff]
    %v33 = vcombine.high %v29, %v29
    %v34 = vcombine.high %v30, %v30
    %vm37 = vcmask 1043456
    %v38 = vsel %vm37, %v29, 0.0
    %v39 = vsel %vm37, %v33, 0.0
    %v40 = vadd.f32 %v38, %v39
    %41 = vadd.xlane.f32.xlu0 %v40
    %v42 = vpop.xlane.xlu0 %41
    %v43 = vsel %vm37, %v30, 0.0
    %v44 = vsel %vm37, %v34, 0.0
    %v45 = vadd.f32 %v43, %v44
    %46 = vadd.xlane.f32.xlu0 %v45
    %v47 = vpop.xlane.xlu0 %46
    %v48 = vsel %vm37, %v42, 0.0
    %v49 = vsel %vm37, %v47, 0.0
    %v50 = vadd.f32 %v48, %v49
    %v51 = vmul.f32 %v50, 0.001953125
    %v54 = vunpack.c.l.s4 839922192
    %v55 = vunpack.c.0.s8 %v54
    %v56 = vlaneseq
    %v57 = vshrl.u32 %v56, 7
    %v58 = vsub.s32 %v55, %v57
    %v59 = vrot.slane %v51, %v58
    %v61 = vsub.f32 %v29, %v59
    %v62 = vsub.f32 %v30, %v59
    %v63 = vmul.f32 %v61, %v61
    %v64 = vmul.f32 %v62, %v62
    %v67 = vcombine.high %v63, %v63
    %v68 = vcombine.high %v64, %v64
    %v71 = vsel %vm37, %v63, 0.0
    %v72 = vsel %vm37, %v67, 0.0
    %v73 = vadd.f32 %v71, %v72
    %74 = vadd.xlane.f32.xlu0 %v73
    %v75 = vpop.xlane.xlu0 %74
    %v76 = vsel %vm37, %v64, 0.0
    %v77 = vsel %vm37, %v68, 0.0
    %v78 = vadd.f32 %v76, %v77
    %79 = vadd.xlane.f32.xlu0 %v78
    %v80 = vpop.xlane.xlu0 %79
    %v81 = vsel %vm37, %v75, 0.0
    %v82 = vsel %vm37, %v80, 0.0
    %v83 = vadd.f32 %v81, %v82
    %v84 = vmul.f32 %v83, 0.001953125
    %v85 = vadd.f32 %v84, 1e-05
    %v86 = vrsqrt.pop %v85
    %v87 = vld [vmem:[%s1] sm:$0xf]
    %v88 = vmul.f32 %v87, %v86
    %v89 = vld [vmem:[%s2] sm:$0xf]
    %v90 = vmul.f32 %v51, %v88
    %v91 = vsub.f32 %v89, %v90
    %93 = vset.pattern.permute.xlu0 0
    %94 = vperm.xlu0 %93, %v88
    %v95 = vpop.permute.xlu0 %94
    %v97 = vunpack.c.l.s4 839922192
    %v98 = vunpack.c.0.s8 %v97
    %v99 = vlaneseq
    %v100 = vshrl.u32 %v99, 7
    %v101 = vsub.s32 %v98, %v100
    %v102 = vrot.slane %v95, %v101
    %v104 = vmul.f32 %v29, %v102
    %v105 = vmul.f32 %v30, %v102
    %107 = vset.pattern.permute.xlu0 0
    %108 = vperm.xlu0 %107, %v91
    %v109 = vpop.permute.xlu0 %108
    %v111 = vunpack.c.l.s4 839922192
    %v112 = vunpack.c.0.s8 %v111
    %v113 = vlaneseq
    %v114 = vshrl.u32 %v113, 7
    %v115 = vsub.s32 %v112, %v114
    %v116 = vrot.slane %v109, %v115
    %v118 = vadd.f32 %v104, %v116
    %v119 = vadd.f32 %v105, %v116
    %v120 = vmax.f32 %v118, 0.0
    %v121 = vmax.f32 %v119, 0.0
    %122 = vst [vmem:[#allocation5] sm:$0xff] %v120
    %123 = vst [vmem:[#allocation5 + $0x8] sm:$0xff] %v121
    // Predicated region
    $region18: #{tpu_custom_call.1} parent=1 // pred_check
      _
    $region19: #{tpu_custom_call.1} parent=1 // pred_check_branch
      %125 = sbr.rel (0) target = $region21
    $region20: #{tpu_custom_call.1} parent=1 // pred_region
      %s127 = ssub.s32 256, 256
      %128 = vsyncadd [#allocation4], %s127
      %s129 = sshll.u32 [#allocation5], 4
      %s130 = int_to_ptr.vmem [resolvable:$true] %s129
      %135 = dma.vmem_to_hbm [thread:$0]  %s130, 256, %s3, [#allocation4], 128, 128, 8
    $region21: #{tpu_custom_call.1} parent=1 // pred_fallthru
      _
    // Predicated region
    $region22: #{tpu_custom_call.1} parent=1 // pred_check
      _
    $region23: #{tpu_custom_call.1} parent=1 // pred_check_branch
      %137 = sbr.rel (0) target = $region25
    $region24: #{tpu_custom_call.1} parent=1 // pred_region
      %138 = dma.done [#allocation4], 256
    $region25: #{tpu_custom_call.1} parent=1 // pred_fallthru
      _
    %139 = vsyncpa [#allocation3], 1
    %140 = vsyncpa [#allocation4], 1

</llo_original>
